<compile_context>
chip_gen: v7x
topology: tpu7x:2x2x1
jax: 0.10.0
libtpu: 0.0.40
codegen_flags: <defaults>
</compile_context>

<pallas_src>
import functools

import jax
import jax.numpy as jnp
from jax.experimental import pallas as pl
from jax.experimental.pallas import tpu as pltpu


# ---------------- Hyper-parameters (HP) -------------------------------------
class HP:
    R = 4                 # number of rank terms
    LA_outputdim = 32     # hidden dim of the (B, Wh, H) inputs
    Lh1_2d_inputdim = 32  # == LA_outputdim
    Lh1_2d_outputdim = 64
    Lh2_inputdim = 32     # == LA_outputdim
    Lh2_outputdim = 64    # == Lh1_2d_outputdim (required for elementwise mul)


# ---------------- Pallas kernel ----------------------------------------------
def _mtfusion_fused_kernel(x1_ref, x2_ref, w1_ref, b1_ref, w2_ref, b2_ref,
                           o_ref, *, n_rank, d_out):
    """One M-tile: rank-concatenated fused form.

    H1 = x1 @ W1_cat + b1_cat   (tile_M, R*D_out)  -- 256-lane wide, full vregs
    H2 = x2 @ W2_cat + b2_cat
    out = sum over the R contiguous D_out-lane groups of (H1 * H2)
    """
    h1 = jnp.dot(x1_ref[...], w1_ref[...],
                 preferred_element_type=jnp.float32) + b1_ref[...]
    h2 = jnp.dot(x2_ref[...], w2_ref[...],
                 preferred_element_type=jnp.float32) + b2_ref[...]
    p = h1 * h2                                      # (tile_m, R*D_out), f32

    # Tree reduction over the R contiguous d_out-lane groups: full-vreg adds
    # first (pure VPU), one narrow fold at the end -> minimal XLU lane-slices.
    groups = n_rank
    while groups > 1 and groups % 2 == 0:
        half = (groups // 2) * d_out
        p = p[:, :half] + p[:, half:groups * d_out]
        groups //= 2
    acc = p[:, :d_out]
    for r in range(1, groups):                       # only hit for odd R
        acc = acc + p[:, r * d_out:(r + 1) * d_out]

    o_ref[...] = acc.astype(o_ref.dtype)


# ---------------- Parameter preparation (one-time, at load time) -------------
def prepare_mtfusion2_params(w1, b1, w2, b2, matmul_dtype=None):
    """Rank-concatenate weights/biases: W_cat (D_in, R*D_out), b_cat (1, R*D_out).

    matmul_dtype=jnp.bfloat16 halves weight/activation HBM read traffic on
    v6e/v7x (accumulation stays f32 inside the kernel).
    """
    R, D_in, D_out = w1.shape
    w1c = jnp.transpose(w1, (1, 0, 2)).reshape(D_in, R * D_out)
    w2c = jnp.transpose(w2, (1, 0, 2)).reshape(D_in, R * D_out)
    b1c = b1.reshape(1, R * D_out).astype(jnp.float32)
    b2c = b2.reshape(1, R * D_out).astype(jnp.float32)
    if matmul_dtype is not None:
        w1c = w1c.astype(matmul_dtype)
        w2c = w2c.astype(matmul_dtype)
    return w1c, b1c, w2c, b2c


# ---------------- Wrapper -----------------------------------------------------
def mtfusion2_pallas(input_1, input_2, w1c, b1c, w2c, b2c, *,
                     n_rank, d_out, tile_m=4096, out_dtype=None):
    """input_1/input_2: (B, Wh, D_in). w*c: (D_in, R*D_out), b*c: (1, R*D_out)."""
    B, Wh, D_in = input_1.shape
    M = B * Wh
    N = n_rank * d_out
    assert w1c.shape == (D_in, N) and w2c.shape == (D_in, N)
    out_dtype = out_dtype if out_dtype is not None else input_1.dtype

    matmul_dtype = w1c.dtype
    x1 = input_1.reshape(M, D_in).astype(matmul_dtype)
    x2 = input_2.reshape(M, D_in).astype(matmul_dtype)

    kernel = functools.partial(_mtfusion_fused_kernel, n_rank=n_rank,
                               d_out=d_out)

    in_bytes = jnp.dtype(matmul_dtype).itemsize
    out_bytes = jnp.dtype(out_dtype).itemsize
    cost = pl.CostEstimate(
        flops=2 * (2 * M * D_in * N),                 # two branch matmuls
        transcendentals=0,
        bytes_accessed=(2 * M * D_in + 2 * D_in * N) * in_bytes
        + 2 * N * 4 + M * d_out * out_bytes)

    if M <= tile_m:
        # Small M: one invocation, everything resident in VMEM (full-array
        # blocks, so no (8,128) tiling constraint applies), zero grid overhead.
        out = pl.pallas_call(
            kernel,
            out_shape=jax.ShapeDtypeStruct((M, d_out), out_dtype),
            in_specs=[pl.BlockSpec(memory_space=pltpu.MemorySpace.VMEM)] * 6,
            out_specs=pl.BlockSpec(memory_space=pltpu.MemorySpace.VMEM),
            cost_estimate=cost,
        )(x1, x2, w1c, b1c, w2c, b2c)
        return out.reshape(B, Wh, d_out)

    # Large M: always the tiled, pipelined path.  Pad rows up to a multiple of
    # tile_m (padded rows are discarded after the call) so non-divisible M
    # never falls back to giant single-block VMEM allocations.
    n_tiles = pl.cdiv(M, tile_m)
    m_pad = n_tiles * tile_m
    if m_pad != M:
        x1 = jnp.pad(x1, ((0, m_pad - M), (0, 0)))
        x2 = jnp.pad(x2, ((0, m_pad - M), (0, 0)))

    out = pl.pallas_call(
        kernel,
        out_shape=jax.ShapeDtypeStruct((m_pad, d_out), out_dtype),
        grid_spec=pltpu.PrefetchScalarGridSpec(
            num_scalar_prefetch=0,
            grid=(n_tiles,),
            in_specs=[
                pl.BlockSpec((tile_m, D_in), lambda i: (i, 0)),   # x1 tile
                pl.BlockSpec((tile_m, D_in), lambda i: (i, 0)),   # x2 tile
                pl.BlockSpec((D_in, N), lambda i: (0, 0)),        # W1_cat
                pl.BlockSpec((1, N), lambda i: (0, 0)),           # b1_cat
                pl.BlockSpec((D_in, N), lambda i: (0, 0)),        # W2_cat
                pl.BlockSpec((1, N), lambda i: (0, 0)),           # b2_cat
            ],
            out_specs=pl.BlockSpec((tile_m, d_out), lambda i: (i, 0)),
        ),
        compiler_params=pltpu.CompilerParams(
            dimension_semantics=("parallel",)),       # rows independent -> 2-TC
        cost_estimate=cost,
    )(x1, x2, w1c, b1c, w2c, b2c)

    if m_pad != M:
        out = out[:M]
    return out.reshape(B, Wh, d_out)


# ---------------- Pure-JAX reference -----------------------------------------
def mtfusion2_ref(input_1, input_2, w1, b1, w2, b2):
    B, Wh, D_in = input_1.shape
    x1 = input_1.reshape(B * Wh, D_in)
    x2 = input_2.reshape(B * Wh, D_in)
    h1 = jnp.einsum("md,rdo->rmo", x1, w1) + b1           # (R, M, D_out)
    h2 = jnp.einsum("md,rdo->rmo", x2, w2) + b2
    out = (h2 * h1).sum(axis=0)
    return out.reshape(B, Wh, -1)


# ---------------- Main --------------------------------------------------------
if __name__ == "__main__":
    key = jax.random.PRNGKey(0)
    k_x1, k_x2, k_w1, k_b1, k_w2, k_b2, k_y1, k_y2 = jax.random.split(key, 8)

    B, Wh = 2, 8
    D_in, D_out, R = HP.LA_outputdim, HP.Lh2_outputdim, HP.R

    input_1 = jax.random.normal(k_x1, (B, Wh, D_in), jnp.float32)
    input_2 = jax.random.normal(k_x2, (B, Wh, D_in), jnp.float32)

    # Deterministic synthetic parameters (shapes from the nn.Linear lists).
    # Stored transposed: (R, D_in, D_out); biases as (R, 1, D_out).
    scale = 1.0 / jnp.sqrt(jnp.float32(D_in))
    w1 = jax.random.uniform(k_w1, (R, D_in, D_out), jnp.float32, -scale, scale)
    b1 = jax.random.uniform(k_b1, (R, 1, D_out), jnp.float32, -scale, scale)
    w2 = jax.random.uniform(k_w2, (R, D_in, D_out), jnp.float32, -scale, scale)
    b2 = jax.random.uniform(k_b2, (R, 1, D_out), jnp.float32, -scale, scale)

    # One-time parameter layout plumbing (rank concatenation).
    w1c, b1c, w2c, b2c = prepare_mtfusion2_params(w1, b1, w2, b2)

    # --- small-M path (matches the module's example usage) ---
    out = mtfusion2_pallas(input_1, input_2, w1c, b1c, w2c, b2c,
                           n_rank=R, d_out=D_out)
    out = jax.block_until_ready(out)
    ref = mtfusion2_ref(input_1, input_2, w1, b1, w2, b2)
    assert out.shape == (B, Wh, D_out), out.shape
    assert jnp.allclose(out, ref, atol=1e-4, rtol=1e-4), \
        float(jnp.max(jnp.abs(out - ref)))

    # --- tiled path sanity check: non-divisible M goes through padding ---
    B2, Wh2 = 13, 80                                   # M = 1040, not % 256
    y1 = jax.random.normal(k_y1, (B2, Wh2, D_in), jnp.float32)
    y2 = jax.random.normal(k_y2, (B2, Wh2, D_in), jnp.float32)
    out2 = mtfusion2_pallas(y1, y2, w1c, b1c, w2c, b2c,
                            n_rank=R, d_out=D_out, tile_m=256)
    out2 = jax.block_until_ready(out2)
    ref2 = mtfusion2_ref(y1, y2, w1, b1, w2, b2)
    assert out2.shape == (B2, Wh2, D_out), out2.shape
    assert jnp.allclose(out2, ref2, atol=1e-4, rtol=1e-4), \
        float(jnp.max(jnp.abs(out2 - ref2)))

    print("KERNEL_OK")
</pallas_src>

<mosaic_0001>
module attributes {stable_mosaic.version = 11 : i64} {
  func.func @_mtfusion_fused_kernel(%arg0: memref<16x32xf32, #tpu.memory_space<vmem>>, %arg1: memref<16x32xf32, #tpu.memory_space<vmem>>, %arg2: memref<32x256xf32, #tpu.memory_space<vmem>>, %arg3: memref<1x256xf32, #tpu.memory_space<vmem>>, %arg4: memref<32x256xf32, #tpu.memory_space<vmem>>, %arg5: memref<1x256xf32, #tpu.memory_space<vmem>>, %arg6: memref<16x64xf32, #tpu.memory_space<vmem>>) attributes {dimension_semantics = [], scalar_prefetch = 0 : i64, scratch_operands = 0 : i64, tpu.core_type = #tpu.core_type<tc>} {
    %c0 = arith.constant 0 : index
    %c0_0 = arith.constant 0 : index
    %0 = vector.load %arg0[%c0, %c0_0] : memref<16x32xf32, #tpu.memory_space<vmem>>, vector<16x32xf32>
    %c0_1 = arith.constant 0 : index
    %c0_2 = arith.constant 0 : index
    %1 = vector.load %arg2[%c0_1, %c0_2] : memref<32x256xf32, #tpu.memory_space<vmem>>, vector<32x256xf32>
    %cst = arith.constant dense<0.000000e+00> : vector<16x256xf32>
    %2 = tpu.matmul %0, %1, %cst {dimension_numbers = #tpu.dot_dimension_numbers<[1], [0], [0], [1], [0, 0, 1, 1], [], []>} : vector<16x32xf32>, vector<32x256xf32>, vector<16x256xf32> -> vector<16x256xf32>
    %c0_3 = arith.constant 0 : index
    %c0_4 = arith.constant 0 : index
    %3 = vector.load %arg3[%c0_3, %c0_4] : memref<1x256xf32, #tpu.memory_space<vmem>>, vector<1x256xf32>
    %4 = vector.broadcast %3 : vector<1x256xf32> to vector<16x256xf32>
    %5 = arith.addf %2, %4 : vector<16x256xf32>
    %c0_5 = arith.constant 0 : index
    %c0_6 = arith.constant 0 : index
    %6 = vector.load %arg1[%c0_5, %c0_6] : memref<16x32xf32, #tpu.memory_space<vmem>>, vector<16x32xf32>
    %c0_7 = arith.constant 0 : index
    %c0_8 = arith.constant 0 : index
    %7 = vector.load %arg4[%c0_7, %c0_8] : memref<32x256xf32, #tpu.memory_space<vmem>>, vector<32x256xf32>
    %cst_9 = arith.constant dense<0.000000e+00> : vector<16x256xf32>
    %8 = tpu.matmul %6, %7, %cst_9 {dimension_numbers = #tpu.dot_dimension_numbers<[1], [0], [0], [1], [0, 0, 1, 1], [], []>} : vector<16x32xf32>, vector<32x256xf32>, vector<16x256xf32> -> vector<16x256xf32>
    %c0_10 = arith.constant 0 : index
    %c0_11 = arith.constant 0 : index
    %9 = vector.load %arg5[%c0_10, %c0_11] : memref<1x256xf32, #tpu.memory_space<vmem>>, vector<1x256xf32>
    %10 = vector.broadcast %9 : vector<1x256xf32> to vector<16x256xf32>
    %11 = arith.addf %8, %10 : vector<16x256xf32>
    %12 = arith.mulf %5, %11 : vector<16x256xf32>
    %13 = vector.extract_strided_slice %12 {offsets = [0, 0], sizes = [16, 128], strides = [1, 1]} : vector<16x256xf32> to vector<16x128xf32>
    %14 = vector.extract_strided_slice %12 {offsets = [0, 128], sizes = [16, 128], strides = [1, 1]} : vector<16x256xf32> to vector<16x128xf32>
    %15 = arith.addf %13, %14 : vector<16x128xf32>
    %16 = vector.extract_strided_slice %15 {offsets = [0, 0], sizes = [16, 64], strides = [1, 1]} : vector<16x128xf32> to vector<16x64xf32>
    %17 = vector.extract_strided_slice %15 {offsets = [0, 64], sizes = [16, 64], strides = [1, 1]} : vector<16x128xf32> to vector<16x64xf32>
    %18 = arith.addf %16, %17 : vector<16x64xf32>
    %c0_12 = arith.constant 0 : index
    %c0_13 = arith.constant 0 : index
    %19 = vector.load %arg6[%c0_12, %c0_13] : memref<16x64xf32, #tpu.memory_space<vmem>>, vector<16x64xf32>
    tpu.vector_store %arg6[%c0_12, %c0_13], %18 {strides = array<i32>} : memref<16x64xf32, #tpu.memory_space<vmem>>, vector<16x64xf32>,
    return
  }
}

</mosaic_0001>

<llo_original>
// kernel: tpu_custom_call.1
$region0: #{tpu_custom_call.1}
  #allocation0 [shape = 'u32[]', space=smem, size = 0x4, offset = 0x4, fixed_abs, tag = 'smem constant byte address 0x4 - core index']
  #allocation1 [shape = 'u32[144,128]{1,0:T(1,128)}', space=vmem, size = 0x12000, scoped, tag = 'internal scratch']
  %s0 = inlined_call_operand.hbm [shape: f32[16,32], index: 0, kind: input, shape index: {}]
  %s1 = inlined_call_operand.hbm [shape: f32[16,32], index: 1, kind: input, shape index: {}]
  %s2 = inlined_call_operand.hbm [shape: f32[32,256], index: 2, kind: input, shape index: {}]
  %s3 = inlined_call_operand.vmem [shape: f32[1,256], index: 3, kind: input, shape index: {}]
  %s4 = inlined_call_operand.hbm [shape: f32[32,256], index: 4, kind: input, shape index: {}]
  %s5 = inlined_call_operand.vmem [shape: f32[1,256], index: 5, kind: input, shape index: {}]
  %s6 = inlined_call_operand.hbm [shape: f32[16,64], index: 6, kind: output, shape index: {}]
  %s7 = sld [smem:[#allocation0]]
  $region50: #{tpu_custom_call.1} parent=0
    _
  %s9 = ssub.s32 1, %s7
  %s10 = scalar_select 0, %s9, %s7
  $region1: #{tpu_custom_call.1} parent=0
    #allocation2 [shape = 'u8[8192]{0}', space=vmem, size = 0x2000, scoped, tag = 'input window, operand 0, single buffered']
    #allocation3 [shape = 's32[1]{0}', space=sflag, size = 0x4, scoped, tag = 'scoped memory for tpu_custom_call.1']
    #allocation4 [shape = 's32[1]{0}', space=sflag, size = 0x4, scoped, tag = 'scoped memory for tpu_custom_call.1']
    #allocation5 [shape = 'u8[8192]{0}', space=vmem, size = 0x2000, scoped, tag = 'input window, operand 1, single buffered']
    #allocation6 [shape = 's32[1]{0}', space=sflag, size = 0x4, scoped, tag = 'scoped memory for tpu_custom_call.1']
    #allocation7 [shape = 'u8[32768]{0}', space=vmem, size = 0x8000, scoped, tag = 'input window, operand 2, single buffered']
    #allocation8 [shape = 'u8[32768]{0}', space=vmem, size = 0x8000, scoped, tag = 'input window, operand 4, single buffered']
    #allocation9 [shape = 's32[1]{0}', space=sflag, size = 0x4, scoped, tag = 'scoped memory for tpu_custom_call.1']
    #allocation10 [shape = 'u8[8192]{0}', space=vmem, size = 0x2000, scoped, tag = 'output window, operand 0, single buffered']
    %11 = vsyncpa [#allocation3], 0
    %12 = vsyncpa [#allocation6], 0
    %13 = vsyncpa [#allocation9], 0
    %14 = vsyncpa [#allocation4], 0
    // Predicated region
    $region2: #{tpu_custom_call.1} parent=1 // pred_check
      _
    $region3: #{tpu_custom_call.1} parent=1 // pred_check_branch
      %16 = sbr.rel (0) target = $region5
    $region4: #{tpu_custom_call.1} parent=1 // pred_region
      %s18 = ssub.s32 256, 256
      %19 = vsyncadd [#allocation3], %s18
      %s20 = sshll.u32 [#allocation2], 4
      %s21 = int_to_ptr.vmem [resolvable:$true] %s20
      %26 = dma.hbm_to_vmem [thread:$0]  %s0, 256, %s21, [#allocation3], 128, 128, 8
    $region5: #{tpu_custom_call.1} parent=1 // pred_fallthru
      _
    // Predicated region
    $region6: #{tpu_custom_call.1} parent=1 // pred_check
      _
    $region7: #{tpu_custom_call.1} parent=1 // pred_check_branch
      %28 = sbr.rel (0) target = $region9
    $region8: #{tpu_custom_call.1} parent=1 // pred_region
      %s30 = ssub.s32 256, 256
      %31 = vsyncadd [#allocation6], %s30
      %s32 = sshll.u32 [#allocation5], 4
      %s33 = int_to_ptr.vmem [resolvable:$true] %s32
      %38 = dma.hbm_to_vmem [thread:$0]  %s1, 256, %s33, [#allocation6], 128, 128, 8
    $region9: #{tpu_custom_call.1} parent=1 // pred_fallthru
      _
    // Predicated region
    $region10: #{tpu_custom_call.1} parent=1 // pred_check
      _
    $region11: #{tpu_custom_call.1} parent=1 // pred_check_branch
      %40 = sbr.rel (0) target = $region13
    $region12: #{tpu_custom_call.1} parent=1 // pred_region
      %s42 = ssub.s32 1024, 1024
      %43 = vsyncadd [#allocation6], %s42
      %s44 = sshll.u32 [#allocation7], 4
      %s45 = int_to_ptr.vmem [resolvable:$true] %s44
      %50 = dma.hbm_to_vmem [thread:$0]  %s2, 1024, %s45, [#allocation6], 256, 256, 16
    $region13: #{tpu_custom_call.1} parent=1 // pred_fallthru
      _
    // Predicated region
    $region14: #{tpu_custom_call.1} parent=1 // pred_check
      _
    $region15: #{tpu_custom_call.1} parent=1 // pred_check_branch
      %52 = sbr.rel (0) target = $region17
    $region16: #{tpu_custom_call.1} parent=1 // pred_region
      _
    $region17: #{tpu_custom_call.1} parent=1 // pred_fallthru
      _
    // Predicated region
    $region18: #{tpu_custom_call.1} parent=1 // pred_check
      _
    $region19: #{tpu_custom_call.1} parent=1 // pred_check_branch
      %54 = sbr.rel (0) target = $region21
    $region20: #{tpu_custom_call.1} parent=1 // pred_region
      %s56 = ssub.s32 1024, 1024
      %57 = vsyncadd [#allocation9], %s56
      %s58 = sshll.u32 [#allocation8], 4
      %s59 = int_to_ptr.vmem [resolvable:$true] %s58
      %64 = dma.hbm_to_vmem [thread:$0]  %s4, 1024, %s59, [#allocation9], 256, 256, 16
    $region21: #{tpu_custom_call.1} parent=1 // pred_fallthru
      _
    // Predicated region
    $region22: #{tpu_custom_call.1} parent=1 // pred_check
      _
    $region23: #{tpu_custom_call.1} parent=1 // pred_check_branch
      %66 = sbr.rel (0) target = $region25
    $region24: #{tpu_custom_call.1} parent=1 // pred_region
      _
    $region25: #{tpu_custom_call.1} parent=1 // pred_fallthru
      _
    // Predicated region
    $region26: #{tpu_custom_call.1} parent=1 // pred_check
      _
    $region27: #{tpu_custom_call.1} parent=1 // pred_check_branch
      %68 = sbr.rel (0) target = $region29
    $region28: #{tpu_custom_call.1} parent=1 // pred_region
      %69 = dma.done [#allocation3], 256
    $region29: #{tpu_custom_call.1} parent=1 // pred_fallthru
      _
    // Predicated region
    $region30: #{tpu_custom_call.1} parent=1 // pred_check
      _
    $region31: #{tpu_custom_call.1} parent=1 // pred_check_branch
      %71 = sbr.rel (0) target = $region33
    $region32: #{tpu_custom_call.1} parent=1 // pred_region
      %72 = dma.done [#allocation6], 256
    $region33: #{tpu_custom_call.1} parent=1 // pred_fallthru
      _
    // Predicated region
    $region34: #{tpu_custom_call.1} parent=1 // pred_check
      _
    $region35: #{tpu_custom_call.1} parent=1 // pred_check_branch
      %74 = sbr.rel (0) target = $region37
    $region36: #{tpu_custom_call.1} parent=1 // pred_region
      %75 = dma.done [#allocation6], 1024
    $region37: #{tpu_custom_call.1} parent=1 // pred_fallthru
      _
    // Predicated region
    $region38: #{tpu_custom_call.1} parent=1 // pred_check
      _
    $region39: #{tpu_custom_call.1} parent=1 // pred_check_branch
      %77 = sbr.rel (0) target = $region41
    $region40: #{tpu_custom_call.1} parent=1 // pred_region
      %78 = dma.done [#allocation9], 1024
    $region41: #{tpu_custom_call.1} parent=1 // pred_fallthru
      _
    %v79 = vld [vmem:[#allocation2] sm:$0xff]
    %v80 = vld [vmem:[#allocation2 + $0x8] sm:$0xff]
    %v81 = vld [vmem:[#allocation7] sm:$0xff]
    %v82 = vld [vmem:[#allocation7 + $0x8] sm:$0xff]
    %v83 = vld [vmem:[#allocation7 + $0x10] sm:$0xff]
    %v84 = vld [vmem:[#allocation7 + $0x18] sm:$0xff]
    %v85 = vld [vmem:[#allocation7 + $0x20] sm:$0xff]
    %v86 = vld [vmem:[#allocation7 + $0x28] sm:$0xff]
    %v87 = vld [vmem:[#allocation7 + $0x30] sm:$0xff]
    %v88 = vld [vmem:[#allocation7 + $0x38] sm:$0xff]
    %v89 = vld [vmem:[%s3] sm:$0x3]
    %v91 = vlaneseq
    %v92 = vshrl.u32 %v91, 7
    %v93 = vsub.s32 0, %v92
    %v94 = vrot.slane %v89, %v93
    %v95 = vlaneseq
    %v96 = vshrl.u32 %v95, 7
    %v97 = vsub.s32 1, %v96
    %v98 = vrot.slane %v89, %v97
    %vm101 = vcmask 261120
    %v103 = vsel %vm101, %v79, 0
    %v106 = vsel %vm101, %v80, 0
    %108 = vmatprep.subr.mxu0 %v82
    %109 = vmatpush1.msra.mxu0 %v81
    %110 = vmatprep.subr.mxu0 %v84
    %111 = vmatpush1.msra.mxu0 %v83
    %112 = vmatprep.subr.mxu0 %v86
    %113 = vmatpush1.msra.mxu0 %v85
    %114 = vmatprep.subr.mxu0 %v88
    %115 = vmatpush1.msra.mxu0 %v87
    %116 = vmatprep.subr.mxu0 0.0
    %117 = vmatpush1.msra.mxu0 0.0
    %118 = vmatprep.subr.mxu0 0.0
    %119 = vmatpush1.msra.mxu0 0.0
    %120 = vmatprep.subr.mxu0 0.0
    %121 = vmatpush1.msra.mxu0 0.0
    %122 = vmatprep.subr.mxu0 0.0
    %123 = vmatpush1.msra.mxu0 0.0
    %124 = vmatprep.subr.mxu0 0.0
    %125 = vmatpush1.msra.mxu0 0.0
    %126 = vmatprep.subr.mxu0 0.0
    %127 = vmatpush1.msra.mxu0 0.0
    %128 = vmatprep.subr.mxu0 0.0
    %129 = vmatpush1.msra.mxu0 0.0
    %130 = vmatprep.subr.mxu0 0.0
    %131 = vmatpush1.msra.mxu0 0.0
    %132 = vmatprep.subr.mxu0 0.0
    %133 = vmatpush1.msra.mxu0 0.0
    %134 = vmatprep.subr.mxu0 0.0
    %135 = vmatpush1.msra.mxu0 0.0
    %136 = vmatprep.subr.mxu0 0.0
    %137 = vmatpush1.msra.mxu0 0.0
    %138 = vmatprep.subr.mxu0 0.0
    %139 = vmatpush1.msra.mxu0 0.0
    %140 = vmatprep.subr.mxu0 0.0
    %141 = vmatpush1.msra.mxu0 0.0
    %142 = vmatprep.subr.mxu0 0.0
    %143 = vmatpush1.msra.mxu0 0.0
    %144 = vmatprep.subr.mxu0 0.0
    %145 = vmatpush1.msra.mxu0 0.0
    %146 = vmatprep.subr.mxu0 0.0
    %147 = vmatpush1.msra.mxu0 0.0
    %148 = vmatprep.subr.mxu0 0.0
    %149 = vmatpush1.msra.mxu0 0.0
    %150 = vmatprep.subr.mxu0 0.0
    %151 = vmatpush1.msra.mxu0 0.0
    %152 = vmatprep.subr.mxu0 0.0
    %153 = vmatpush1.msra.mxu0 0.0
    %154 = vmatprep.subr.mxu0 0.0
    %155 = vmatpush1.msra.mxu0 0.0
    %156 = vmatprep.subr.mxu0 0.0
    %157 = vmatpush1.msra.mxu0 0.0
    %158 = vmatprep.subr.mxu0 0.0
    %159 = vmatpush1.msra.mxu0 0.0
    %160 = vmatprep.subr.mxu0 0.0
    %161 = vmatpush1.msra.mxu0 0.0
    %162 = vmatprep.subr.mxu0 0.0
    %163 = vmatpush1.msra.mxu0 0.0
    %164 = vmatprep.subr.mxu0 0.0
    %165 = vmatpush1.msra.mxu0 0.0
    %166 = vmatprep.subr.mxu0 0.0
    %167 = vmatpush1.msra.mxu0 0.0
    %168 = vmatprep.subr.mxu0 0.0
    %169 = vmatpush1.msra.mxu0 0.0
    %170 = vmatprep.subr.mxu0 0.0
    %171 = vmatpush1.msra.mxu0 0.0
    %172 = vmatprep.mubr.f32.mxu0 0.0
    %173 = vmatmul.mubr.f32.gmra.mrb[0].mxu0 %v103
    %v174 = vpop.f32.mrb[0].mxu0
    %v175 = vadd.f32 %v94, %v174
    %v176 = vpop.f32.mrb[0].mxu0
    %v177 = vadd.f32 %v98, %v176
    %178 = vmatprep.mubr.f32.mxu0 0.0
    %179 = vmatmul.mubr.f32.gmra.mrb[0].mxu0 %v106
    %v180 = vpop.f32.mrb[0].mxu0
    %v181 = vadd.f32 %v94, %v180
    %v182 = vpop.f32.mrb[0].mxu0
    %v183 = vadd.f32 %v98, %v182
    %184 = vdwg.mxu0
    %v185 = vld [vmem:[#allocation5] sm:$0xff]
    %v186 = vld [vmem:[#allocation5 + $0x8] sm:$0xff]
    %v187 = vld [vmem:[#allocation8] sm:$0xff]
    %v188 = vld [vmem:[#allocation8 + $0x8] sm:$0xff]
    %v189 = vld [vmem:[#allocation8 + $0x10] sm:$0xff]
    %v190 = vld [vmem:[#allocation8 + $0x18] sm:$0xff]
    %v191 = vld [vmem:[#allocation8 + $0x20] sm:$0xff]
    %v192 = vld [vmem:[#allocation8 + $0x28] sm:$0xff]
    %v193 = vld [vmem:[#allocation8 + $0x30] sm:$0xff]
    %v194 = vld [vmem:[#allocation8 + $0x38] sm:$0xff]
    %v195 = vld [vmem:[%s5] sm:$0x3]
    %v197 = vlaneseq
    %v198 = vshrl.u32 %v197, 7
    %v199 = vsub.s32 0, %v198
    %v200 = vrot.slane %v195, %v199
    %v201 = vlaneseq
    %v202 = vshrl.u32 %v201, 7
    %v203 = vsub.s32 1, %v202
    %v204 = vrot.slane %v195, %v203
    %v208 = vsel %vm101, %v185, 0
    %v211 = vsel %vm101, %v186, 0
    %213 = vmatprep.subr.mxu0 %v188
    %214 = vmatpush1.msra.mxu0 %v187
    %215 = vmatprep.subr.mxu0 %v190
    %216 = vmatpush1.msra.mxu0 %v189
    %217 = vmatprep.subr.mxu0 %v192
    %218 = vmatpush1.msra.mxu0 %v191
    %219 = vmatprep.subr.mxu0 %v194
    %220 = vmatpush1.msra.mxu0 %v193
    %221 = vmatprep.subr.mxu0 0.0
    %222 = vmatpush1.msra.mxu0 0.0
    %223 = vmatprep.subr.mxu0 0.0
    %224 = vmatpush1.msra.mxu0 0.0
    %225 = vmatprep.subr.mxu0 0.0
    %226 = vmatpush1.msra.mxu0 0.0
    %227 = vmatprep.subr.mxu0 0.0
    %228 = vmatpush1.msra.mxu0 0.0
    %229 = vmatprep.subr.mxu0 0.0
    %230 = vmatpush1.msra.mxu0 0.0
    %231 = vmatprep.subr.mxu0 0.0
    %232 = vmatpush1.msra.mxu0 0.0
    %233 = vmatprep.subr.mxu0 0.0
    %234 = vmatpush1.msra.mxu0 0.0
    %235 = vmatprep.subr.mxu0 0.0
    %236 = vmatpush1.msra.mxu0 0.0
    %237 = vmatprep.subr.mxu0 0.0
    %238 = vmatpush1.msra.mxu0 0.0
    %239 = vmatprep.subr.mxu0 0.0
    %240 = vmatpush1.msra.mxu0 0.0
    %241 = vmatprep.subr.mxu0 0.0
    %242 = vmatpush1.msra.mxu0 0.0
    %243 = vmatprep.subr.mxu0 0.0
    %244 = vmatpush1.msra.mxu0 0.0
    %245 = vmatprep.subr.mxu0 0.0
    %246 = vmatpush1.msra.mxu0 0.0
    %247 = vmatprep.subr.mxu0 0.0
    %248 = vmatpush1.msra.mxu0 0.0
    %249 = vmatprep.subr.mxu0 0.0
    %250 = vmatpush1.msra.mxu0 0.0
    %251 = vmatprep.subr.mxu0 0.0
    %252 = vmatpush1.msra.mxu0 0.0
    %253 = vmatprep.subr.mxu0 0.0
    %254 = vmatpush1.msra.mxu0 0.0
    %255 = vmatprep.subr.mxu0 0.0
    %256 = vmatpush1.msra.mxu0 0.0
    %257 = vmatprep.subr.mxu0 0.0
    %258 = vmatpush1.msra.mxu0 0.0
    %259 = vmatprep.subr.mxu0 0.0
    %260 = vmatpush1.msra.mxu0 0.0
    %261 = vmatprep.subr.mxu0 0.0
    %262 = vmatpush1.msra.mxu0 0.0
    %263 = vmatprep.subr.mxu0 0.0
    %264 = vmatpush1.msra.mxu0 0.0
    %265 = vmatprep.subr.mxu0 0.0
    %266 = vmatpush1.msra.mxu0 0.0
    %267 = vmatprep.subr.mxu0 0.0
    %268 = vmatpush1.msra.mxu0 0.0
    %269 = vmatprep.subr.mxu0 0.0
    %270 = vmatpush1.msra.mxu0 0.0
    %271 = vmatprep.subr.mxu0 0.0
    %272 = vmatpush1.msra.mxu0 0.0
    %273 = vmatprep.subr.mxu0 0.0
    %274 = vmatpush1.msra.mxu0 0.0
    %275 = vmatprep.subr.mxu0 0.0
    %276 = vmatpush1.msra.mxu0 0.0
    %277 = vmatprep.mubr.f32.mxu0 0.0
    %278 = vmatmul.mubr.f32.gmra.mrb[0].mxu0 %v208
    %v279 = vpop.f32.mrb[0].mxu0
    %v280 = vadd.f32 %v200, %v279
    %v281 = vpop.f32.mrb[0].mxu0
    %v282 = vadd.f32 %v204, %v281
    %283 = vmatprep.mubr.f32.mxu0 0.0
    %284 = vmatmul.mubr.f32.gmra.mrb[0].mxu0 %v211
    %v285 = vpop.f32.mrb[0].mxu0
    %v286 = vadd.f32 %v200, %v285
    %v287 = vpop.f32.mrb[0].mxu0
    %v288 = vadd.f32 %v204, %v287
    %289 = vdwg.mxu0
    %v290 = vmul.f32 %v175, %v280
    %v291 = vmul.f32 %v177, %v282
    %v292 = vmul.f32 %v181, %v286
    %v293 = vmul.f32 %v183, %v288
    %v294 = vadd.f32 %v290, %v291
    %v295 = vadd.f32 %v292, %v293
    %298 = vrot.lane.b32.xlu0 %v294, 64
    %v299 = vpop.permute.xlu0 %298
    %300 = vrot.lane.b32.xlu0 %v295, 64
    %v301 = vpop.permute.xlu0 %300
    %v304 = vadd.f32 %v294, %v299
    %v305 = vadd.f32 %v295, %v301
    %vm306 = vcmask 523264
    %307 = vst.msk [vmem:[#allocation10] sm:$0xff] %vm306, %v304
    %308 = vst.msk [vmem:[#allocation10 + $0x8] sm:$0xff] %vm306, %v305
    // Predicated region
    $region42: #{tpu_custom_call.1} parent=1 // pred_check
      _
    $region43: #{tpu_custom_call.1} parent=1 // pred_check_branch
      %310 = sbr.rel (0) target = $region45
    $region44: #{tpu_custom_call.1} parent=1 // pred_region
      %s312 = ssub.s32 256, 256
      %313 = vsyncadd [#allocation4], %s312
      %s314 = sshll.u32 [#allocation10], 4
      %s315 = int_to_ptr.vmem [resolvable:$true] %s314
      %320 = dma.vmem_to_hbm [thread:$0]  %s315, 256, %s6, [#allocation4], 128, 128, 8
    $region45: #{tpu_custom_call.1} parent=1 // pred_fallthru
      _
    // Predicated region
    $region46: #{tpu_custom_call.1} parent=1 // pred_check
      _
    $region47: #{tpu_custom_call.1} parent=1 // pred_check_branch
      %322 = sbr.rel (0) target = $region49
    $region48: #{tpu_custom_call.1} parent=1 // pred_region
      %323 = dma.done [#allocation4], 256
    $region49: #{tpu_custom_call.1} parent=1 // pred_fallthru
      _
    %324 = vsyncpa [#allocation3], 1
    %325 = vsyncpa [#allocation6], 1
    %326 = vsyncpa [#allocation9], 1
    %327 = vsyncpa [#allocation4], 1

</llo_original>
